<compile_context>
chip_gen: v6e
topology: v6e:2x2x1
jax: 0.10.0
libtpu: 0.0.40
codegen_flags: <defaults>
</compile_context>

<pallas_src>
import jax
import jax.numpy as jnp
from jax.experimental import pallas as pl
from jax.experimental.pallas import tpu as pltpu


def _cross_attn_fusion_kernel(x2_ref, w_ref, b_ref, o_ref):
    """One batch tile of: out = x2 @ W + b  (W = Wv@Wo, b = bv@Wo + bo)."""
    acc = jnp.dot(x2_ref[...], w_ref[...], preferred_element_type=jnp.float32)
    o_ref[...] = (acc + b_ref[...]).astype(o_ref.dtype)


_SMALL_STREAM_BYTES = 4 << 20   # below this, one block (grid=1) beats tiling
_VMEM_TILE_BUDGET = 24 << 20    # conservative: under v7x 64 MiB / scoped limits


def _round_up(x, m):
    return ((x + m - 1) // m) * m


def _pick_batch_tile(B, d2, out_dim, x_itemsize, out_itemsize, batch_tile):
    if batch_tile is not None:
        if batch_tile > B:
            raise ValueError(f"batch_tile={batch_tile} exceeds batch size {B}")
        if batch_tile != B and batch_tile % 8 != 0:
            raise ValueError("batch_tile must equal B or be a multiple of 8")
        return batch_tile

    row_bytes = d2 * x_itemsize + out_dim * out_itemsize
    if B * row_bytes <= _SMALL_STREAM_BYTES:
        # Whole problem is a fraction of a MiB of HBM traffic; per-step grid
        # overhead (~0.35 us) would dominate, so use a single block.
        return B

    # Large batch: stream tiles.  Biggest tile whose double-buffered in+out
    # tiles fit the VMEM budget, capped at 8192 rows and at ceil(B/2) so the
    # grid has >= 2 steps (lets v7x shard the batch axis across both TCs).
    vmem_rows = max(8, _VMEM_TILE_BUDGET // (2 * row_bytes))
    half_b = _round_up(pl.cdiv(B, 2), 8)
    tb = min(8192, vmem_rows, half_b)
    tb = max(8, (tb // 8) * 8)
    return B if tb >= B else tb


def _vmem_limit_bytes(tb, d2, out_dim, x_itemsize, w_itemsize, out_itemsize):
    # Double-buffered streamed tiles + (conservatively double-counted) resident
    # fused weight and f32 bias, with 2x headroom for compiler scratch.
    tile_bytes = 2 * tb * (d2 * x_itemsize + out_dim * out_itemsize)
    weight_bytes = 2 * (d2 * out_dim * w_itemsize + out_dim * 4)
    needed = tile_bytes + weight_bytes
    return int(min(100 << 20, max(2 * needed, 8 << 20)))


def cross_attention_fusion(x1, x2, params, *, batch_tile=None):
    """params: dict with wq,bq,wk,bk,wv,bv,wo,bo (weights (in,out), biases (1,out)).

    x1 / wq / bq / wk / bk are accepted for API parity with the PyTorch module
    but are provably dead (softmax over a length-1 axis is identically 1.0),
    so they are not shipped to the TPU kernel.
    """
    del x1  # dead input: Q(x1) never affects the output.

    B, d2 = x2.shape
    out_dim = params["wo"].shape[1]

    # Algebraic fusion of V-projection and out-projection, precomputed in f32
    # to avoid compounding rounding, then stored in the params' native dtype
    # so bf16 weights keep full-rate MXU and minimal VMEM footprint.
    w_dtype = jnp.result_type(params["wv"].dtype, params["wo"].dtype)
    wv32 = params["wv"].astype(jnp.float32)
    wo32 = params["wo"].astype(jnp.float32)
    w_fused = jnp.dot(wv32, wo32).astype(w_dtype)                   # (d2, out_dim)
    b_fused = (jnp.dot(params["bv"].astype(jnp.float32), wo32)
               + params["bo"].astype(jnp.float32))                  # (1, out_dim) f32

    # bf16 in -> bf16 out (no forced f32 promotion of the output stream).
    out_dtype = jnp.result_type(x2.dtype, params["wv"].dtype)

    x_isz = jnp.dtype(x2.dtype).itemsize
    o_isz = jnp.dtype(out_dtype).itemsize
    w_isz = jnp.dtype(w_dtype).itemsize

    tb = _pick_batch_tile(B, d2, out_dim, x_isz, o_isz, batch_tile)
    grid = (pl.cdiv(B, tb),)

    cost = pl.CostEstimate(
        flops=2 * B * d2 * out_dim,
        transcendentals=0,
        bytes_accessed=(B * (d2 * x_isz + out_dim * o_isz)
                        + d2 * out_dim * w_isz + out_dim * 4),
    )

    return pl.pallas_call(
        _cross_attn_fusion_kernel,
        grid=grid,
        in_specs=[
            pl.BlockSpec((tb, d2), lambda i: (i, 0)),           # x2 batch tile (streamed)
            pl.BlockSpec((d2, out_dim), lambda i: (0, 0)),      # fused weight (VMEM-resident)
            pl.BlockSpec((1, out_dim), lambda i: (0, 0)),       # fused bias (f32)
        ],
        out_specs=pl.BlockSpec((tb, out_dim), lambda i: (i, 0)),
        out_shape=jax.ShapeDtypeStruct((B, out_dim), out_dtype),
        compiler_params=pltpu.CompilerParams(
            dimension_semantics=("parallel",),  # megacore when grid > 1
            vmem_limit_bytes=_vmem_limit_bytes(tb, d2, out_dim, x_isz, w_isz, o_isz),
        ),
        cost_estimate=cost,
    )(x2, w_fused, b_fused)


def init_params(key, d1, d2, out_dim):
    """Deterministic synthetic parameter init (matches nn.Linear shapes)."""
    ks = jax.random.split(key, 8)

    def lin(kw, kb, fan_in, fan_out):
        bound = 1.0 / jnp.sqrt(jnp.float32(fan_in))
        w = jax.random.uniform(kw, (fan_in, fan_out), jnp.float32, -bound, bound)
        b = jax.random.uniform(kb, (1, fan_out), jnp.float32, -bound, bound)
        return w, b

    wq, bq = lin(ks[0], ks[1], d1, out_dim)
    wk, bk = lin(ks[2], ks[3], d2, out_dim)
    wv, bv = lin(ks[4], ks[5], d2, out_dim)
    wo, bo = lin(ks[6], ks[7], out_dim, out_dim)
    return dict(wq=wq, bq=bq, wk=wk, bk=bk, wv=wv, bv=bv, wo=wo, bo=bo)


def reference_forward(x1, x2, p):
    """Pure-JAX reference mirroring the PyTorch module EXACTLY (incl. Q/K/softmax)."""
    q = (x1 @ p["wq"] + p["bq"])[:, None, :]
    k = (x2 @ p["wk"] + p["bk"])[:, None, :]
    v = (x2 @ p["wv"] + p["bv"])[:, None, :]
    scores = q @ jnp.swapaxes(k, -2, -1) / jnp.sqrt(jnp.float32(q.shape[-1]))
    attn = jax.nn.softmax(scores, axis=-1)
    ctx = (attn @ v)[:, 0, :]
    return ctx @ p["wo"] + p["bo"]


if __name__ == "__main__":
    key = jax.random.PRNGKey(0)
    k1, k2, k3, k4, kp = jax.random.split(key, 5)

    # Small shapes consistent with the module.
    B, d1, d2, out_dim = 2, 32, 48, 64
    x1 = jax.random.normal(k1, (B, d1), jnp.float32)
    x2 = jax.random.normal(k2, (B, d2), jnp.float32)
    params = init_params(kp, d1, d2, out_dim)

    out = jax.block_until_ready(cross_attention_fusion(x1, x2, params))
    ref = reference_forward(x1, x2, params)
    assert out.shape == (B, out_dim)
    assert out.dtype == ref.dtype
    assert jnp.allclose(out, ref, atol=2e-4, rtol=1e-3), "mismatch vs. reference (small B)"

    # Larger batch: default path picks a single block (grid=1), which is the
    # right call at these feature dims (streamed bytes << per-step overhead).
    Bl = 512
    x1l = jax.random.normal(k3, (Bl, d1), jnp.float32)
    x2l = jax.random.normal(k4, (Bl, d2), jnp.float32)
    refl = reference_forward(x1l, x2l, params)

    outl = jax.block_until_ready(cross_attention_fusion(x1l, x2l, params))
    assert outl.shape == (Bl, out_dim)
    assert jnp.allclose(outl, refl, atol=2e-4, rtol=1e-3), "mismatch vs. reference (grid=1)"

    # Also exercise the tiled (grid=2) streaming path for correctness.
    outt = jax.block_until_ready(
        cross_attention_fusion(x1l, x2l, params, batch_tile=256))
    assert jnp.allclose(outt, refl, atol=2e-4, rtol=1e-3), "mismatch vs. reference (tiled B)"

    print("KERNEL_OK")
</pallas_src>

<mosaic_0001>
module attributes {stable_mosaic.version = 11 : i64} {
  func.func @_cross_attn_fusion_kernel(%arg0: i32, %arg1: memref<2x48xf32, #tpu.memory_space<vmem>>, %arg2: memref<48x64xf32, #tpu.memory_space<vmem>>, %arg3: memref<1x64xf32, #tpu.memory_space<vmem>>, %arg4: memref<2x64xf32, #tpu.memory_space<vmem>>) attributes {dimension_semantics = [#tpu.dimension_semantics<parallel>], iteration_bounds = array<i64: 1>, scalar_prefetch = 0 : i64, scratch_operands = 0 : i64, tpu.core_type = #tpu.core_type<tc>, window_params = [{transform_indices = @transform_0, window_bounds = array<i64: 2, 48>}, {pipeline_mode = #tpu.pipeline_mode<synchronous>, transform_indices = @transform_1, window_bounds = array<i64: 48, 64>}, {pipeline_mode = #tpu.pipeline_mode<synchronous>, transform_indices = @transform_2, window_bounds = array<i64: 1, 64>}, {transform_indices = @transform_3, window_bounds = array<i64: 2, 64>}]} {
    %c0 = arith.constant 0 : index
    %c0_0 = arith.constant 0 : index
    %0 = vector.load %arg1[%c0, %c0_0] : memref<2x48xf32, #tpu.memory_space<vmem>>, vector<2x48xf32>
    %c0_1 = arith.constant 0 : index
    %c0_2 = arith.constant 0 : index
    %1 = vector.load %arg2[%c0_1, %c0_2] : memref<48x64xf32, #tpu.memory_space<vmem>>, vector<48x64xf32>
    %cst = arith.constant dense<0.000000e+00> : vector<2x64xf32>
    %2 = tpu.matmul %0, %1, %cst {dimension_numbers = #tpu.dot_dimension_numbers<[1], [0], [0], [1], [0, 0, 1, 1], [], []>} : vector<2x48xf32>, vector<48x64xf32>, vector<2x64xf32> -> vector<2x64xf32>
    %c0_3 = arith.constant 0 : index
    %c0_4 = arith.constant 0 : index
    %3 = vector.load %arg3[%c0_3, %c0_4] : memref<1x64xf32, #tpu.memory_space<vmem>>, vector<1x64xf32>
    %4 = vector.broadcast %3 : vector<1x64xf32> to vector<2x64xf32>
    %5 = arith.addf %2, %4 : vector<2x64xf32>
    %c0_5 = arith.constant 0 : index
    %c0_6 = arith.constant 0 : index
    %6 = vector.load %arg4[%c0_5, %c0_6] : memref<2x64xf32, #tpu.memory_space<vmem>>, vector<2x64xf32>
    tpu.vector_store %arg4[%c0_5, %c0_6], %5 {strides = array<i32>} : memref<2x64xf32, #tpu.memory_space<vmem>>, vector<2x64xf32>,
    return
  }
  func.func @transform_0(%arg0: i32) -> (i32, i32) {
    %c0_i32 = arith.constant 0 : i32
    %c0_i32_0 = arith.constant 0 : i32
    return %arg0, %c0_i32 : i32, i32
  }
  func.func @transform_1(%arg0: i32) -> (i32, i32) {
    %c0_i32 = arith.constant 0 : i32
    %c0_i32_0 = arith.constant 0 : i32
    %c0_i32_1 = arith.constant 0 : i32
    return %c0_i32, %c0_i32_0 : i32, i32
  }
  func.func @transform_2(%arg0: i32) -> (i32, i32) {
    %c0_i32 = arith.constant 0 : i32
    %c0_i32_0 = arith.constant 0 : i32
    %c0_i32_1 = arith.constant 0 : i32
    return %c0_i32, %c0_i32_0 : i32, i32
  }
  func.func @transform_3(%arg0: i32) -> (i32, i32) {
    %c0_i32 = arith.constant 0 : i32
    %c0_i32_0 = arith.constant 0 : i32
    return %arg0, %c0_i32 : i32, i32
  }
}

</mosaic_0001>

<llo_original>
// kernel: tpu_custom_call.1
$region0: #{tpu_custom_call.1}
  #allocation0 [shape = 'u32[]', space=smem, size = 0x4, offset = 0x4, fixed_abs, tag = 'smem constant byte address 0x4 - core index']
  #allocation1 [shape = 'u32[144,128]{1,0:T(1,128)}', space=vmem, size = 0x12000, scoped, tag = 'internal scratch']
  %s0 = inlined_call_operand.hbm [shape: f32[2,48], index: 0, kind: input, shape index: {}]
  %s1 = inlined_call_operand.hbm [shape: f32[48,64], index: 1, kind: input, shape index: {}]
  %s2 = inlined_call_operand.vmem [shape: f32[1,64], index: 2, kind: input, shape index: {}]
  %s3 = inlined_call_operand.hbm [shape: f32[2,64], index: 3, kind: output, shape index: {}]
  %s4 = sld [smem:[#allocation0]]
  $region30: #{tpu_custom_call.1} parent=0
    _
  %s6 = ssub.s32 1, %s4
  %s7 = scalar_select 0, %s6, %s4
  $region1: #{tpu_custom_call.1} parent=0
    #allocation2 [shape = 'u8[1024]{0}', space=vmem, size = 0x400, scoped, tag = 'input window, operand 0, single buffered']
    #allocation3 [shape = 's32[1]{0}', space=sflag, size = 0x4, scoped, tag = 'scoped memory for tpu_custom_call.1']
    #allocation4 [shape = 's32[1]{0}', space=sflag, size = 0x4, scoped, tag = 'scoped memory for tpu_custom_call.1']
    #allocation5 [shape = 'u8[24576]{0}', space=vmem, size = 0x6000, scoped, tag = 'input window, operand 1, single buffered']
    #allocation6 [shape = 's32[1]{0}', space=sflag, size = 0x4, scoped, tag = 'scoped memory for tpu_custom_call.1']
    #allocation7 [shape = 'u8[1024]{0}', space=vmem, size = 0x400, scoped, tag = 'output window, operand 0, single buffered']
    %8 = vsyncpa [#allocation3], 0
    %9 = vsyncpa [#allocation6], 0
    %10 = vsyncpa [#allocation4], 0
    // Predicated region
    $region2: #{tpu_custom_call.1} parent=1 // pred_check
      _
    $region3: #{tpu_custom_call.1} parent=1 // pred_check_branch
      %12 = sbr.rel (0) target = $region5
    $region4: #{tpu_custom_call.1} parent=1 // pred_region
      %s14 = ssub.s32 32, 32
      %15 = vsyncadd [#allocation3], %s14
      %s17 = sshll.u32 [#allocation2], 4
      %s18 = int_to_ptr.vmem [resolvable:$true] %s17
      %20 = dma.hbm_to_vmem [thread:$0]  %s0, 32, %s18, [#allocation3]
    $region5: #{tpu_custom_call.1} parent=1 // pred_fallthru
      _
    // Predicated region
    $region6: #{tpu_custom_call.1} parent=1 // pred_check
      _
    $region7: #{tpu_custom_call.1} parent=1 // pred_check_branch
      %22 = sbr.rel (0) target = $region9
    $region8: #{tpu_custom_call.1} parent=1 // pred_region
      %s24 = ssub.s32 768, 768
      %25 = vsyncadd [#allocation6], %s24
      %s26 = sshll.u32 [#allocation5], 4
      %s27 = int_to_ptr.vmem [resolvable:$true] %s26
      %32 = dma.hbm_to_vmem [thread:$0]  %s1, 768, %s27, [#allocation6], 128, 128, 8
    $region9: #{tpu_custom_call.1} parent=1 // pred_fallthru
      _
    // Predicated region
    $region10: #{tpu_custom_call.1} parent=1 // pred_check
      _
    $region11: #{tpu_custom_call.1} parent=1 // pred_check_branch
      %34 = sbr.rel (0) target = $region13
    $region12: #{tpu_custom_call.1} parent=1 // pred_region
      _
    $region13: #{tpu_custom_call.1} parent=1 // pred_fallthru
      _
    // Predicated region
    $region14: #{tpu_custom_call.1} parent=1 // pred_check
      _
    $region15: #{tpu_custom_call.1} parent=1 // pred_check_branch
      %36 = sbr.rel (0) target = $region17
    $region16: #{tpu_custom_call.1} parent=1 // pred_region
      %37 = dma.done [#allocation3], 32
    $region17: #{tpu_custom_call.1} parent=1 // pred_fallthru
      _
    // Predicated region
    $region18: #{tpu_custom_call.1} parent=1 // pred_check
      _
    $region19: #{tpu_custom_call.1} parent=1 // pred_check_branch
      %39 = sbr.rel (0) target = $region21
    $region20: #{tpu_custom_call.1} parent=1 // pred_region
      %40 = dma.done [#allocation6], 768
    $region21: #{tpu_custom_call.1} parent=1 // pred_fallthru
      _
    %v41 = vld [vmem:[#allocation2] sm:$0x3]
    %v42 = vld [vmem:[#allocation5] sm:$0xff]
    %v43 = vld [vmem:[#allocation5 + $0x8] sm:$0xff]
    %v44 = vld [vmem:[#allocation5 + $0x10] sm:$0xff]
    %v45 = vld [vmem:[#allocation5 + $0x18] sm:$0xff]
    %v46 = vld [vmem:[#allocation5 + $0x20] sm:$0xff]
    %v47 = vld [vmem:[#allocation5 + $0x28] sm:$0xff]
    %v48 = vld [vmem:[%s2] sm:$0x1]
    %v50 = vlaneseq
    %v51 = vshrl.u32 %v50, 7
    %v52 = vsub.s32 0, %v51
    %v53 = vrot.slane %v48, %v52
    %vm55 = vcmask 392192
    %v57 = vsel %vm55, %v41, 0
    %59 = vmatprep.subr.mxu0 0.0
    %60 = vmatpush1.msra.mxu0 0.0
    %61 = vmatprep.subr.mxu0 0.0
    %62 = vmatpush1.msra.mxu0 0.0
    %63 = vmatprep.subr.mxu0 0.0
    %64 = vmatpush1.msra.mxu0 0.0
    %65 = vmatprep.subr.mxu0 0.0
    %66 = vmatpush1.msra.mxu0 0.0
    %67 = vmatprep.subr.mxu0 0.0
    %68 = vmatpush1.msra.mxu0 0.0
    %69 = vmatprep.subr.mxu0 0.0
    %70 = vmatpush1.msra.mxu0 0.0
    %71 = vmatprep.subr.mxu0 0.0
    %72 = vmatpush1.msra.mxu0 0.0
    %73 = vmatprep.subr.mxu0 0.0
    %74 = vmatpush1.msra.mxu0 0.0
    %75 = vmatprep.subr.mxu0 0.0
    %76 = vmatpush1.msra.mxu0 0.0
    %77 = vmatprep.subr.mxu0 0.0
    %78 = vmatpush1.msra.mxu0 0.0
    %79 = vmatprep.subr.mxu0 0.0
    %80 = vmatpush1.msra.mxu0 %v47
    %81 = vmatprep.subr.mxu0 0.0
    %82 = vmatpush1.msra.mxu0 %v46
    %83 = vmatprep.subr.mxu0 0.0
    %84 = vmatpush1.msra.mxu0 %v45
    %85 = vmatprep.subr.mxu0 0.0
    %86 = vmatpush1.msra.mxu0 %v44
    %87 = vmatprep.subr.mxu0 0.0
    %88 = vmatpush1.msra.mxu0 %v43
    %89 = vmatprep.subr.mxu0 0.0
    %90 = vmatpush1.msra.mxu0 %v42
    %91 = vmatprep.subr.mxu0 0.0
    %92 = vmatpush2.msra.mxu0 0.0
    %93 = vmatprep.subr.mxu0 0.0
    %94 = vmatpush2.msra.mxu0 0.0
    %95 = vmatprep.subr.mxu0 0.0
    %96 = vmatpush2.msra.mxu0 0.0
    %97 = vmatprep.subr.mxu0 0.0
    %98 = vmatpush2.msra.mxu0 0.0
    %99 = vmatprep.subr.mxu0 0.0
    %100 = vmatpush2.msra.mxu0 0.0
    %101 = vmatprep.subr.mxu0 0.0
    %102 = vmatpush2.msra.mxu0 0.0
    %103 = vmatprep.subr.mxu0 0.0
    %104 = vmatpush2.msra.mxu0 0.0
    %105 = vmatprep.subr.mxu0 0.0
    %106 = vmatpush2.msra.mxu0 0.0
    %107 = vmatprep.subr.mxu0 0.0
    %108 = vmatpush2.msra.mxu0 0.0
    %109 = vmatprep.subr.mxu0 0.0
    %110 = vmatpush2.msra.mxu0 0.0
    %111 = vmatprep.subr.mxu0 0.0
    %112 = vmatpush2.msra.mxu0 0.0
    %113 = vmatprep.subr.mxu0 0.0
    %114 = vmatpush2.msra.mxu0 0.0
    %115 = vmatprep.subr.mxu0 0.0
    %116 = vmatpush2.msra.mxu0 0.0
    %117 = vmatprep.subr.mxu0 0.0
    %118 = vmatpush2.msra.mxu0 0.0
    %119 = vmatprep.subr.mxu0 0.0
    %120 = vmatpush2.msra.mxu0 0.0
    %121 = vmatprep.subr.mxu0 0.0
    %122 = vmatpush2.msra.mxu0 0.0
    %123 = vmatprep.mubr.f32.mxu0 0.0
    %124 = vmatmul.mubr.f32.gmra.mxu0 %v57
    %v125 = vpop.f32.mrf.mxu0
    %v126 = vadd.f32 %v53, %v125
    %v127 = vpop.f32.mrf.mxu0
    %128 = vdwg.mxu0
    %vm129 = vcmask 517120
    %130 = vst.msk [vmem:[#allocation7] sm:$0x3] %vm129, %v126
    // Predicated region
    $region22: #{tpu_custom_call.1} parent=1 // pred_check
      _
    $region23: #{tpu_custom_call.1} parent=1 // pred_check_branch
      %132 = sbr.rel (0) target = $region25
    $region24: #{tpu_custom_call.1} parent=1 // pred_region
      %s134 = ssub.s32 32, 32
      %135 = vsyncadd [#allocation4], %s134
      %s137 = sshll.u32 [#allocation7], 4
      %s138 = int_to_ptr.vmem [resolvable:$true] %s137
      %140 = dma.vmem_to_hbm [thread:$0]  %s138, 32, %s3, [#allocation4]
    $region25: #{tpu_custom_call.1} parent=1 // pred_fallthru
      _
    // Predicated region
    $region26: #{tpu_custom_call.1} parent=1 // pred_check
      _
    $region27: #{tpu_custom_call.1} parent=1 // pred_check_branch
      %142 = sbr.rel (0) target = $region29
    $region28: #{tpu_custom_call.1} parent=1 // pred_region
      %143 = dma.done [#allocation4], 32
    $region29: #{tpu_custom_call.1} parent=1 // pred_fallthru
      _
    %144 = vsyncpa [#allocation3], 1
    %145 = vsyncpa [#allocation6], 1
    %146 = vsyncpa [#allocation4], 1

</llo_original>
